<compile_context>
chip_gen: v7x
topology: tpu7x:2x2x1
jax: 0.10.0
libtpu: 0.0.40
codegen_flags: <defaults>
</compile_context>

<pallas_src>
import numpy as np
import jax
import jax.numpy as jnp
from jax.experimental import pallas as pl
from jax.experimental.pallas import tpu as pltpu

SCALER = 20.0
_COS_EPS = 1e-8
_VMEM_LIMIT_BYTES = 48 * 1024 * 1024


def _cparams(semantics):
    return pltpu.CompilerParams(dimension_semantics=semantics,
                                vmem_limit_bytes=_VMEM_LIMIT_BYTES)


def _round_up(x, m):
    return ((x + m - 1) // m) * m


def _choose_pblk(P, bytes_per_pixel, budget_bytes=8 << 20):
    """Largest 128-multiple pixel block whose biggest resident input block stays
    under ~budget (x2 for double buffering) -> safe on v5e/v6e/v7x."""
    pblk = 2048
    while pblk > 128 and pblk * bytes_per_pixel > budget_bytes:
        pblk //= 2
    return min(pblk, _round_up(P, 128))


# ----------------------------- Pallas kernels -----------------------------

def encoder_kernel(x_ref, w_ref, b_ref, o_ref):
    # x: (1, 3, pblk) f32   w: (C, 3)  b: (C, 1)  ->  o: (1, C, pblk) bf16
    # 1x1 conv with K=3 as three VPU broadcast-FMAs + ReLU (lane dim = pixels).
    x = x_ref[0]                                   # [3, pblk]
    w = w_ref[...]                                 # [C, 3]
    y = (w[:, 0:1] * x[0:1, :]
         + w[:, 1:2] * x[1:2, :]
         + w[:, 2:3] * x[2:3, :]
         + b_ref[...])                             # [C, pblk] f32
    o_ref[0] = jnp.maximum(y, 0.0).astype(o_ref.dtype)


def proto_kernel(fts_ref, wgt_ref, o_ref):
    # getFeatures (masked average pooling after bilinear resize) fused with
    # getPrototype (mean over shots), tiled over pixel blocks.  The bilinear
    # resize was pushed onto the mask; wgt folds mask-down / (sum+1e-5) / n_shots.
    # fts: (1, S, 1, C, pblk) bf16   wgt: (1, S, 1, 1, pblk) f32 -> o: (1,1,C,1) f32
    # o_ref is resident across the pixel-block ("arbitrary") axis -> accumulator.
    @pl.when(pl.program_id(2) == 0)
    def _():
        o_ref[...] = jnp.zeros_like(o_ref)

    S = fts_ref.shape[1]
    C = fts_ref.shape[3]
    acc = jnp.zeros((C, 1), jnp.float32)
    for s in range(S):                             # S small & static
        f = fts_ref[0, s, 0].astype(jnp.float32)   # [C, pblk]
        w = wgt_ref[0, s, 0]                       # [1, pblk]
        acc = acc + jnp.sum(f * w, axis=1, keepdims=True)   # VPU mul + lane reduce
    o_ref[0, 0] += acc


def sim_pred_kernel(p_ref, qf_ref, t_ref, o_ref):
    # negSim + getPred, pixel-block tiled.  Prototypes arrive pre-normalized and
    # pre-scaled by -SCALER (host-side), so only the query norm is needed here.
    # p: (1, ways, C) bf16   qf: (1, 1, C, pblk) bf16   t: (1,1) SMEM
    # o: (1, 1, ways, pblk) f32
    protos = p_ref[0]                              # [ways, C] bf16
    qf = qf_ref[0, 0]                              # [C, pblk] bf16
    dots = jnp.dot(protos, qf, preferred_element_type=jnp.float32)   # MXU, [ways, pblk]
    qf32 = qf.astype(jnp.float32)
    qsq = jnp.sum(qf32 * qf32, axis=0, keepdims=True)                # [1, pblk] f32
    # torch.cosine_similarity clamps EACH norm at eps (proto norm clamped host-side).
    inv_q = jax.lax.rsqrt(jnp.maximum(qsq, _COS_EPS * _COS_EPS))     # EUP
    sim = dots * inv_q                             # already includes -SCALER / ||p||
    t = t_ref[0, 0]
    o_ref[0, 0] = 1.0 - jax.nn.sigmoid(0.5 * (sim - t))


def upsample_kernel(pred_ref, vh_ref, vwT_ref, o_ref):
    # Separable bilinear upsample (align_corners=True) + cat(1-p, p).
    # pred: (1, 1, ways, Hf, Wf) f32   vh: (H_pad, Hf) bf16   vwT: (Wf, W_pad) bf16
    # o: (1, 2*ways, H_pad, W_pad) f32 -- padded => unmasked lane-dense stores.
    n_ways = pred_ref.shape[2]
    vh = vh_ref[...]
    vwT = vwT_ref[...]
    for w in range(n_ways):                        # ways small & static
        p = pred_ref[0, 0, w].astype(jnp.bfloat16)                       # [Hf, Wf]
        t1 = jnp.dot(vh, p, preferred_element_type=jnp.float32)          # [H_pad, Wf]
        up = jnp.dot(t1.astype(jnp.bfloat16), vwT,
                     preferred_element_type=jnp.float32)                 # [H_pad, W_pad]
        o_ref[0, w] = 1.0 - up
        o_ref[0, n_ways + w] = up


# ----------------------------- pallas_call wrappers -----------------------------

def run_encoder(xs, w_c3, b_c1, pblk):
    nimg, _, p = xs.shape
    c = w_c3.shape[0]
    return pl.pallas_call(
        encoder_kernel,
        out_shape=jax.ShapeDtypeStruct((nimg, c, p), jnp.bfloat16),
        grid=(nimg, p // pblk),
        in_specs=[
            pl.BlockSpec((1, 3, pblk), lambda n, j: (n, 0, j)),
            pl.BlockSpec((c, 3), lambda n, j: (0, 0)),
            pl.BlockSpec((c, 1), lambda n, j: (0, 0)),
        ],
        out_specs=pl.BlockSpec((1, c, pblk), lambda n, j: (n, 0, j)),
        compiler_params=_cparams(("parallel", "parallel")),
    )(xs, w_c3, b_c1)


def run_protos(supp_fts, wgt, pblk):
    n_ways, S, B, C, P = supp_fts.shape
    return pl.pallas_call(
        proto_kernel,
        out_shape=jax.ShapeDtypeStruct((n_ways, B, C, 1), jnp.float32),
        grid=(n_ways, B, P // pblk),                  # pixel reduction axis last
        in_specs=[
            pl.BlockSpec((1, S, 1, C, pblk), lambda way, epi, k: (way, 0, epi, 0, k)),
            pl.BlockSpec((1, S, 1, 1, pblk), lambda way, epi, k: (way, 0, epi, 0, k)),
        ],
        out_specs=pl.BlockSpec((1, 1, C, 1), lambda way, epi, k: (way, epi, 0, 0)),
        compiler_params=_cparams(("parallel", "parallel", "arbitrary")),
    )(supp_fts, wgt)


def run_sim_pred(protos_bf, qry_fts, t11, batch_size, pblk):
    n_q, Bq, C, P = qry_fts.shape
    n_ways = protos_bf.shape[1]
    return pl.pallas_call(
        sim_pred_kernel,
        out_shape=jax.ShapeDtypeStruct((batch_size, Bq, n_ways, P), jnp.float32),
        # Large parallel pixel-block axis first -> feeds both v7x TensorCores.
        grid=(P // pblk, batch_size, Bq),
        in_specs=[
            pl.BlockSpec((1, n_ways, C), lambda nb, epi, q: (epi, 0, 0)),
            # NOTE: faithful to the reference, `epi` indexes the n_queries axis.
            pl.BlockSpec((1, 1, C, pblk), lambda nb, epi, q: (epi, q, 0, nb)),
            pl.BlockSpec(memory_space=pltpu.MemorySpace.SMEM),
        ],
        out_specs=pl.BlockSpec((1, 1, n_ways, pblk),
                               lambda nb, epi, q: (epi, q, 0, nb)),
        compiler_params=_cparams(("parallel", "parallel", "parallel")),
    )(protos_bf, qry_fts, t11)


def run_upsample(pred5, vh_b, vwT_b):
    B, Bq, n_ways, Hf, Wf = pred5.shape
    Hp = vh_b.shape[0]
    Wp = vwT_b.shape[1]
    return pl.pallas_call(
        upsample_kernel,
        out_shape=jax.ShapeDtypeStruct((Bq * B, 2 * n_ways, Hp, Wp), jnp.float32),
        grid=(B, Bq),
        in_specs=[
            pl.BlockSpec((1, 1, n_ways, Hf, Wf), lambda epi, q: (epi, q, 0, 0, 0)),
            pl.BlockSpec((Hp, Hf), lambda epi, q: (0, 0)),
            pl.BlockSpec((Wf, Wp), lambda epi, q: (0, 0)),
        ],
        # Block index = q * B + epi reproduces torch.stack(outputs, dim=1).view(-1, ...)
        out_specs=pl.BlockSpec((1, 2 * n_ways, Hp, Wp),
                               lambda epi, q: (q * B + epi, 0, 0, 0)),
        compiler_params=_cparams(("parallel", "parallel")),
    )(pred5, vh_b, vwT_b)


# ----------------------------- glue -----------------------------

def bilinear_matrix(out_size, in_size, align_corners):
    """Row-stochastic matrix M s.t. upsampled = M @ x, matching F.interpolate."""
    M = np.zeros((out_size, in_size), dtype=np.float32)
    for i in range(out_size):
        if align_corners:
            src = 0.0 if out_size == 1 else i * (in_size - 1) / (out_size - 1)
        else:
            src = (i + 0.5) * in_size / out_size - 0.5
            src = max(src, 0.0)
        i0 = min(int(np.floor(src)), in_size - 1)
        i1 = min(i0 + 1, in_size - 1)
        w1 = src - i0
        M[i, i0] += 1.0 - w1
        M[i, i1] += w1
    return M


def fewshot_seg_forward(params, supp_imgs, fore_mask, qry_imgs,
                        train=False, t_loss_scaler=1.0):
    n_ways = len(supp_imgs)
    n_shots = len(supp_imgs[0])
    n_queries = len(qry_imgs)
    batch_size_q = qry_imgs[0].shape[0]
    batch_size = supp_imgs[0][0].shape[0]
    H, W = supp_imgs[0][0].shape[-2:]

    imgs_concat = jnp.concatenate(
        [jnp.concatenate(way, axis=0) for way in supp_imgs]
        + [jnp.concatenate(qry_imgs, axis=0)], axis=0)            # [Nimg,3,H,W]

    # TODO(synk): TVDeeplabRes101Encoder (ResNet-101 backbone) replaced with a
    # synthetic 2x2-avgpool + 1x1-conv + ReLU encoder; backbone not buildable in-script.
    nimg = imgs_concat.shape[0]
    Hf, Wf = H // 2, W // 2
    P = Hf * Wf
    xs = imgs_concat.reshape(nimg, 3, Hf, 2, Wf, 2).mean(axis=(3, 5))
    xs = xs.reshape(nimg, 3, P).astype(jnp.float32)               # [Nimg,3,P]

    w_c3 = jnp.transpose(params["enc_w"]).astype(jnp.float32)     # [C,3]
    b_c1 = jnp.transpose(params["enc_b"]).astype(jnp.float32)     # [C,1]
    C = w_c3.shape[0]

    # Pixel-block tiling: pad P to a 128-aligned multiple of pblk (keeps all
    # loads/stores unmasked and per-step VMEM bounded on every generation).
    pblk = _choose_pblk(P, n_shots * (2 * C + 4))
    P_pad = _round_up(P, pblk)
    xs = jnp.pad(xs, ((0, 0), (0, 0), (0, P_pad - P)))

    feats = run_encoder(xs, w_c3, b_c1, pblk)                     # [Nimg,C,P_pad] bf16

    n_supp = n_ways * n_shots * batch_size
    supp_fts = feats[:n_supp].reshape(n_ways, n_shots, batch_size, C, P_pad)
    qry_fts = feats[n_supp:].reshape(n_queries, batch_size_q, C, P_pad)

    fore_mask_arr = jnp.stack([jnp.stack(way, axis=0) for way in fore_mask],
                              axis=0).astype(jnp.float32)         # [ways,S,B,H,W]

    # getFeatures' bilinear resize of support features pushed onto the mask:
    # sum_hw fts_up*mask == sum_p fts * (uh^T @ mask @ uw).  Fold /denom /n_shots.
    uh = jnp.asarray(bilinear_matrix(H, Hf, align_corners=False))          # [H,Hf]
    uw = jnp.asarray(bilinear_matrix(W, Wf, align_corners=False))          # [W,Wf]
    mdown = jnp.einsum('hi,wsbhx,xj->wsbij', uh, fore_mask_arr, uw)        # [ways,S,B,Hf,Wf]
    denom = jnp.sum(fore_mask_arr, axis=(-2, -1))[..., None, None] + 1e-5
    wgt = (mdown / denom / n_shots).reshape(n_ways, n_shots, batch_size, 1, P)
    wgt = jnp.pad(wgt, ((0, 0), (0, 0), (0, 0), (0, 0), (0, P_pad - P)))
    # Padded pixels have wgt == 0 -> no contribution from the (nonzero) padded feats.

    protos_raw = run_protos(supp_fts, wgt, pblk)                  # [ways,B,C,1]
    protos_bwc = jnp.transpose(protos_raw[..., 0], (1, 0, 2))     # [B,ways,C]
    # Pre-normalize prototypes host-side and fold in -SCALER (torch clamps each
    # norm at eps separately); kernel then only needs the query norm.
    pnorm = jnp.sqrt(jnp.sum(protos_bwc * protos_bwc, axis=-1, keepdims=True))
    protos_bf = ((-SCALER) * protos_bwc
                 / jnp.maximum(pnorm, _COS_EPS)).astype(jnp.bfloat16)

    t11 = params["t"].reshape(1, 1).astype(jnp.float32)           # SMEM scalar

    # Faithful to the reference: qry_fts is indexed by `epi` along the n_queries
    # axis inside the per-episode loop, which requires batch_size <= n_queries.
    assert batch_size <= n_queries

    pred_feat = run_sim_pred(protos_bf, qry_fts, t11, batch_size, pblk)  # [B,Bq,ways,P_pad]
    pred5 = pred_feat[..., :P].reshape(batch_size, batch_size_q, n_ways, Hf, Wf)

    # Prediction upsample matrices (align_corners=True).  Pad H to %16 and W to
    # %128 (zero rows/cols) so the kernel's output stores are unmasked; slice off.
    H_pad = _round_up(H, 16)
    W_pad = _round_up(W, 128)
    vh_np = np.zeros((H_pad, Hf), np.float32)
    vh_np[:H] = bilinear_matrix(H, Hf, align_corners=True)
    vwT_np = np.zeros((Wf, W_pad), np.float32)
    vwT_np[:, :W] = bilinear_matrix(W, Wf, align_corners=True).T
    vh_b = jnp.asarray(vh_np, jnp.bfloat16)
    vwT_b = jnp.asarray(vwT_np, jnp.bfloat16)

    out_pad = run_upsample(pred5, vh_b, vwT_b)                    # [Bq*B,2*ways,H_pad,W_pad]
    output = out_pad[:, :, :H, :W]

    # TODO(synk): alignLoss (train=True branch w/ NLLLoss) not implemented; eval path only.
    align_loss = jnp.zeros((1,), jnp.float32)
    t_loss = params["t"] / SCALER
    return output, align_loss / batch_size, t_loss_scaler * t_loss


if __name__ == "__main__":
    key = jax.random.PRNGKey(0)
    n_ways, n_shots, n_queries = 1, 2, 1
    B, Bq = 1, 1
    H = W = 16
    C = 32

    keys = jax.random.split(key, 8)
    supp_imgs = [[jax.random.normal(keys[s], (B, 3, H, W), jnp.float32)
                  for s in range(n_shots)] for _ in range(n_ways)]
    fore_mask = [[(jax.random.uniform(keys[2 + s], (B, H, W)) > 0.5).astype(jnp.float32)
                  for s in range(n_shots)] for _ in range(n_ways)]
    qry_imgs = [jax.random.normal(keys[4], (Bq, 3, H, W), jnp.float32)
                for _ in range(n_queries)]

    params = {
        "enc_w": 0.1 * jax.random.normal(keys[5], (3, C), jnp.float32),
        "enc_b": 0.01 * jax.random.normal(keys[6], (1, C), jnp.float32),
        "t": jnp.array([-10.0], jnp.float32),   # Parameter t, scaler = 20.0
    }

    out, align_loss, t_loss = fewshot_seg_forward(params, supp_imgs, fore_mask, qry_imgs)
    jax.block_until_ready(out)
    jax.block_until_ready(align_loss)
    jax.block_until_ready(t_loss)
    assert out.shape == (B * Bq, 2 * n_ways, H, W), out.shape
    assert align_loss.shape == (1,)
    assert bool(jnp.all(jnp.isfinite(out)))
    print("KERNEL_OK")
</pallas_src>

<mosaic_0001>
module attributes {stable_mosaic.version = 11 : i64} {
  func.func @encoder_kernel(%arg0: i32, %arg1: i32, %arg2: memref<1x3x128xf32, #tpu.memory_space<vmem>>, %arg3: memref<32x3xf32, #tpu.memory_space<vmem>>, %arg4: memref<32x1xf32, #tpu.memory_space<vmem>>, %arg5: memref<1x32x128xbf16, #tpu.memory_space<vmem>>) attributes {dimension_semantics = [#tpu.dimension_semantics<parallel>, #tpu.dimension_semantics<parallel>], iteration_bounds = array<i64: 3, 1>, scalar_prefetch = 0 : i64, scratch_operands = 0 : i64, tpu.core_type = #tpu.core_type<tc>, window_params = [{transform_indices = @transform_0, window_bounds = array<i64: 1, 3, 128>}, {pipeline_mode = #tpu.pipeline_mode<synchronous>, transform_indices = @transform_1, window_bounds = array<i64: 32, 3>}, {pipeline_mode = #tpu.pipeline_mode<synchronous>, transform_indices = @transform_2, window_bounds = array<i64: 32, 1>}, {transform_indices = @transform_3, window_bounds = array<i64: 1, 32, 128>}]} {
    %c0 = arith.constant 0 : index
    %c0_0 = arith.constant 0 : index
    %c0_1 = arith.constant 0 : index
    %0 = vector.load %arg2[%c0, %c0_0, %c0_1] : memref<1x3x128xf32, #tpu.memory_space<vmem>>, vector<1x3x128xf32>
    %1 = vector.shape_cast %0 : vector<1x3x128xf32> to vector<3x128xf32>
    %c0_2 = arith.constant 0 : index
    %c0_3 = arith.constant 0 : index
    %2 = vector.load %arg3[%c0_2, %c0_3] : memref<32x3xf32, #tpu.memory_space<vmem>>, vector<32x3xf32>
    %3 = vector.extract_strided_slice %2 {offsets = [0, 0], sizes = [32, 1], strides = [1, 1]} : vector<32x3xf32> to vector<32x1xf32>
    %4 = vector.extract_strided_slice %1 {offsets = [0, 0], sizes = [1, 128], strides = [1, 1]} : vector<3x128xf32> to vector<1x128xf32>
    %5 = vector.broadcast %3 : vector<32x1xf32> to vector<32x128xf32>
    %6 = vector.broadcast %4 : vector<1x128xf32> to vector<32x128xf32>
    %7 = arith.mulf %5, %6 : vector<32x128xf32>
    %8 = vector.extract_strided_slice %2 {offsets = [0, 1], sizes = [32, 1], strides = [1, 1]} : vector<32x3xf32> to vector<32x1xf32>
    %9 = vector.extract_strided_slice %1 {offsets = [1, 0], sizes = [1, 128], strides = [1, 1]} : vector<3x128xf32> to vector<1x128xf32>
    %10 = vector.broadcast %8 : vector<32x1xf32> to vector<32x128xf32>
    %11 = vector.broadcast %9 : vector<1x128xf32> to vector<32x128xf32>
    %12 = arith.mulf %10, %11 : vector<32x128xf32>
    %13 = arith.addf %7, %12 : vector<32x128xf32>
    %14 = vector.extract_strided_slice %2 {offsets = [0, 2], sizes = [32, 1], strides = [1, 1]} : vector<32x3xf32> to vector<32x1xf32>
    %15 = vector.extract_strided_slice %1 {offsets = [2, 0], sizes = [1, 128], strides = [1, 1]} : vector<3x128xf32> to vector<1x128xf32>
    %16 = vector.broadcast %14 : vector<32x1xf32> to vector<32x128xf32>
    %17 = vector.broadcast %15 : vector<1x128xf32> to vector<32x128xf32>
    %18 = arith.mulf %16, %17 : vector<32x128xf32>
    %19 = arith.addf %13, %18 : vector<32x128xf32>
    %c0_4 = arith.constant 0 : index
    %c0_5 = arith.constant 0 : index
    %20 = vector.load %arg4[%c0_4, %c0_5] : memref<32x1xf32, #tpu.memory_space<vmem>>, vector<32x1xf32>
    %21 = vector.broadcast %20 : vector<32x1xf32> to vector<32x128xf32>
    %22 = arith.addf %19, %21 : vector<32x128xf32>
    %cst = arith.constant 0.000000e+00 : f32
    %23 = vector.broadcast %cst : f32 to vector<32x128xf32>
    %24 = arith.maximumf %22, %23 : vector<32x128xf32>
    %25 = arith.truncf %24 : vector<32x128xf32> to vector<32x128xbf16>
    %c0_6 = arith.constant 0 : index
    %c0_7 = arith.constant 0 : index
    %c0_8 = arith.constant 0 : index
    %26 = vector.load %arg5[%c0_6, %c0_7, %c0_8] : memref<1x32x128xbf16, #tpu.memory_space<vmem>>, vector<1x32x128xbf16>
    %27 = vector.shape_cast %26 : vector<1x32x128xbf16> to vector<32x128xbf16>
    %28 = vector.shape_cast %25 : vector<32x128xbf16> to vector<1x32x128xbf16>
    tpu.vector_store %arg5[%c0_6, %c0_7, %c0_8], %28 {strides = array<i32>} : memref<1x32x128xbf16, #tpu.memory_space<vmem>>, vector<1x32x128xbf16>,
    return
  }
  func.func @transform_0(%arg0: i32, %arg1: i32) -> (i32, i32, i32) {
    %c0_i32 = arith.constant 0 : i32
    %c0_i32_0 = arith.constant 0 : i32
    return %arg0, %c0_i32, %arg1 : i32, i32, i32
  }
  func.func @transform_1(%arg0: i32, %arg1: i32) -> (i32, i32) {
    %c0_i32 = arith.constant 0 : i32
    %c0_i32_0 = arith.constant 0 : i32
    %c0_i32_1 = arith.constant 0 : i32
    return %c0_i32, %c0_i32_0 : i32, i32
  }
  func.func @transform_2(%arg0: i32, %arg1: i32) -> (i32, i32) {
    %c0_i32 = arith.constant 0 : i32
    %c0_i32_0 = arith.constant 0 : i32
    %c0_i32_1 = arith.constant 0 : i32
    return %c0_i32, %c0_i32_0 : i32, i32
  }
  func.func @transform_3(%arg0: i32, %arg1: i32) -> (i32, i32, i32) {
    %c0_i32 = arith.constant 0 : i32
    %c0_i32_0 = arith.constant 0 : i32
    return %arg0, %c0_i32, %arg1 : i32, i32, i32
  }
}

</mosaic_0001>

<llo_original>
// kernel: tpu_custom_call.1
$region0: #{tpu_custom_call.1}
  #allocation0 [shape = 'u32[]', space=smem, size = 0x4, offset = 0x4, fixed_abs, tag = 'smem constant byte address 0x4 - core index']
  #allocation1 [shape = 'u32[144,128]{1,0:T(1,128)}', space=vmem, size = 0x12000, scoped, tag = 'internal scratch']
  %s0 = inlined_call_operand.vmem [shape: f32[3,3,128], index: 0, kind: input, shape index: {}]
  %s1 = inlined_call_operand.vmem [shape: f32[32,3], index: 1, kind: input, shape index: {}]
  %s2 = inlined_call_operand.vmem [shape: f32[32,1], index: 2, kind: input, shape index: {}]
  %s3 = inlined_call_operand.hbm [shape: bf16[3,32,128], index: 3, kind: output, shape index: {}]
  %s4 = sld [smem:[#allocation0]]
  $region45: #{tpu_custom_call.1} parent=0
    _
  %s6 = ssub.s32 1, %s4
  %s7 = scalar_select 0, %s6, %s4
  $region1: #{tpu_custom_call.1} parent=0
    #allocation2 [shape = 'u8[16384]{0}', space=vmem, size = 0x4000, scoped, tag = 'output window, operand 0']
    #allocation3 [shape = 's32[2]{0}', space=sflag, size = 0x8, scoped, tag = 'scoped memory for tpu_custom_call.1']
    %8 = vsyncpa [#allocation3], 0
    %s9 = scalar_lea.sflag [#allocation3], 1
    %10 = vsyncpa %s9, 0
    loop: start=0, step=1, limit=5
    $region2: #{tpu_custom_call.1} parent=1 // loop_pre_header
      _
    $region3: #{tpu_custom_call.1} parent=1 // loop_header
      %s12 = sphi 0, %s16
      %p13 = scmp.ge.s32.totalorder %s12, 5
      %s19 = sphi 0, %s31
      %s20 = sphi 0, %s27
      %s21 = sphi 0, %s19
      %s22 = sphi 0, %s20
      %s23 = sphi 0, %s21
      %s24 = sphi 0, %s22
      %s36 = sphi 0, %s38
      %s39 = sphi 0, %s36
      %s40 = sphi 0, %s39
      %s56 = sphi 0, %s40
      %s60 = sphi 0, %s60
      %s62 = sphi 0, %s60
      %s63 = sphi 0, %s62
      %s77 = sphi 0, %s63
      %s81 = sphi 0, %s81
      %s83 = sphi 0, %s81
      %s84 = sphi 0, %s83
      %s98 = sphi 0, %s84
      %s106 = sphi 0, %s108
      %s109 = sphi 0, %s106
      %s110 = sphi 0, %s109
      %s126 = sphi 0, %s110
    $region4: #{tpu_custom_call.1} parent=1 // loop_header_branch
      %15 = sbr.rel (%p13) target = $region8
    $region5: #{tpu_custom_call.1} parent=1 // loop_body
      %s17 = ssub.s32 %s12, 1
      %s18 = ssub.s32 %s12, 2
      %s25 = sadd.s32 1, %s20
      %p26 = scmp.ge.s32.totalorder %s25, 1
      %s27 = scalar_select %p26, 0, %s25
      %s28 = sadd.s32 1, %s19
      %s29 = scalar_select %p26, %s28, %s19
      %p30 = scmp.ge.s32.totalorder %s29, 3
      %s31 = scalar_select %p30, 0, %s29
      %s32 = ssub.s32 %s19, %s31
      %s33 = ssub.s32 %s20, %s27
      %s34 = sor.u32 %s32, %s33
      %p35 = scmp.eq.s32.totalorder %s34, 0
      %s37 = sadd.s32 %s36, 1
      %s38 = scalar_select %p35, %s36, %s37
      %p41 = pneg %p35
      %p42 = scmp.eq.s32.totalorder %s12, 2
      %p43 = por %p41, %p42
      %p44 = scmp.ne.s32.totalorder %s36, %s39
      %p45 = scmp.eq.s32.totalorder %s12, 0
      %p46 = por %p44, %p45
      %p47 = scmp.ne.s32.totalorder %s36, %s39
      %p48 = scmp.eq.s32.totalorder %s17, 2
      %p49 = por %p47, %p48
      %p50 = scmp.ne.s32.totalorder %s39, %s40
      %p51 = scmp.eq.s32.totalorder %s17, 0
      %p52 = por %p50, %p51
      %p53 = scmp.ne.s32.totalorder %s39, %s40
      %p54 = scmp.eq.s32.totalorder %s18, 2
      %p55 = por %p53, %p54
      %p57 = scmp.ne.s32.totalorder %s40, %s56
      %p58 = scmp.eq.s32.totalorder %s18, 0
      %p59 = por %p57, %p58
      %s61 = sadd.s32 %s60, 1
      %p64 = scmp.eq.s32.totalorder %s12, 2
      %p65 = scmp.ne.s32.totalorder %s60, %s62
      %p66 = scmp.eq.s32.totalorder %s12, 0
      %p67 = por %p65, %p66
      %p68 = scmp.ne.s32.totalorder %s60, %s62
      %p69 = scmp.eq.s32.totalorder %s17, 2
      %p70 = por %p68, %p69
      %p71 = scmp.ne.s32.totalorder %s62, %s63
      %p72 = scmp.eq.s32.totalorder %s17, 0
      %p73 = por %p71, %p72
      %p74 = scmp.ne.s32.totalorder %s62, %s63
      %p75 = scmp.eq.s32.totalorder %s18, 2
      %p76 = por %p74, %p75
      %p78 = scmp.ne.s32.totalorder %s63, %s77
      %p79 = scmp.eq.s32.totalorder %s18, 0
      %p80 = por %p78, %p79
      %s82 = sadd.s32 %s81, 1
      %p85 = scmp.eq.s32.totalorder %s12, 2
      %p86 = scmp.ne.s32.totalorder %s81, %s83
      %p87 = scmp.eq.s32.totalorder %s12, 0
      %p88 = por %p86, %p87
      %p89 = scmp.ne.s32.totalorder %s81, %s83
      %p90 = scmp.eq.s32.totalorder %s17, 2
      %p91 = por %p89, %p90
      %p92 = scmp.ne.s32.totalorder %s83, %s84
      %p93 = scmp.eq.s32.totalorder %s17, 0
      %p94 = por %p92, %p93
      %p95 = scmp.ne.s32.totalorder %s83, %s84
      %p96 = scmp.eq.s32.totalorder %s18, 2
      %p97 = por %p95, %p96
      %p99 = scmp.ne.s32.totalorder %s84, %s98
      %p100 = scmp.eq.s32.totalorder %s18, 0
      %p101 = por %p99, %p100
      %s102 = ssub.s32 %s19, %s31
      %s103 = ssub.s32 %s20, %s27
      %s104 = sor.u32 %s102, %s103
      %p105 = scmp.eq.s32.totalorder %s104, 0
      %s107 = sadd.s32 %s106, 1
      %s108 = scalar_select %p105, %s106, %s107
      %p111 = pneg %p105
      %p112 = scmp.eq.s32.totalorder %s12, 2
      %p113 = por %p111, %p112
      %p114 = scmp.ne.s32.totalorder %s106, %s109
      %p115 = scmp.eq.s32.totalorder %s12, 0
      %p116 = por %p114, %p115
      %p117 = scmp.ne.s32.totalorder %s106, %s109
      %p118 = scmp.eq.s32.totalorder %s17, 2
      %p119 = por %p117, %p118
      %p120 = scmp.ne.s32.totalorder %s109, %s110
      %p121 = scmp.eq.s32.totalorder %s17, 0
      %p122 = por %p120, %p121
      %p123 = scmp.ne.s32.totalorder %s109, %s110
      %p124 = scmp.eq.s32.totalorder %s18, 2
      %p125 = por %p123, %p124
      %p127 = scmp.ne.s32.totalorder %s110, %s126
      %p128 = scmp.eq.s32.totalorder %s18, 0
      %p129 = por %p127, %p128
      %p130 = scmp.le.s32.totalorder 1, %s12
      %p131 = scmp.lt.s32.totalorder %s12, 4
      %p132 = pnand %p130, %p131
      %p133 = pneg %p132
      // Predicated region
      $region9: #{tpu_custom_call.1} parent=5 // pred_check
        _
      $region10: #{tpu_custom_call.1} parent=5 // pred_check_branch
        %135 = sbr.rel (%p132) target = $region12
      $region11: #{tpu_custom_call.1} parent=5 // pred_region
        %s136 = ssub.s32 %s12, 1
        // Predicated region
        $region13: #{tpu_custom_call.1} parent=11 // pred_check
          %p137 = pneg %p73
        $region14: #{tpu_custom_call.1} parent=11 // pred_check_branch
          %139 = sbr.rel (%p137) target = $region16
        $region15: #{tpu_custom_call.1} parent=11 // pred_region
          _
        $region16: #{tpu_custom_call.1} parent=11 // pred_fallthru
          _
        // Predicated region
        $region17: #{tpu_custom_call.1} parent=11 // pred_check
          %p140 = pneg %p94
        $region18: #{tpu_custom_call.1} parent=11 // pred_check_branch
          %142 = sbr.rel (%p140) target = $region20
        $region19: #{tpu_custom_call.1} parent=11 // pred_region
          _
        $region20: #{tpu_custom_call.1} parent=11 // pred_fallthru
          _
      $region12: #{tpu_custom_call.1} parent=5 // pred_fallthru
        _
      %p143 = scmp.lt.s32.totalorder %s12, 3
      // Predicated region
      $region21: #{tpu_custom_call.1} parent=5 // pred_check
        %p144 = pneg %p143
      $region22: #{tpu_custom_call.1} parent=5 // pred_check_branch
        %146 = sbr.rel (%p144) target = $region24
      $region23: #{tpu_custom_call.1} parent=5 // pred_region
        // Predicated region
        $region25: #{tpu_custom_call.1} parent=23 // pred_check
          %p147 = pneg %p46
        $region26: #{tpu_custom_call.1} parent=23 // pred_check_branch
          %149 = sbr.rel (%p147) target = $region28
        $region27: #{tpu_custom_call.1} parent=23 // pred_region
          %p150 = scmp.lt.s32.totalorder %s19, 2
          %s151 = scalar_select %p150, %s19, 2
          %p152 = scmp.lt.s32.totalorder %s20, 0
          %s153 = scalar_select %p152, %s20, 0
          %s154 = sadd.s32 %s153, %s151
          %s155 = smul.addr %s154, 4
          %s156 = scalar_lea.vmem %s0, %s155
        $region28: #{tpu_custom_call.1} parent=23 // pred_fallthru
          _
      $region24: #{tpu_custom_call.1} parent=5 // pred_fallthru
        _
      %p157 = scmp.le.s32.totalorder 1, %s12
      %p158 = scmp.lt.s32.totalorder %s12, 4
      %p159 = pnand %p157, %p158
      %p160 = pneg %p159
      // Predicated region
      $region29: #{tpu_custom_call.1} parent=5 // pred_check
        _
      $region30: #{tpu_custom_call.1} parent=5 // pred_check_branch
        %162 = sbr.rel (%p159) target = $region32
      $region31: #{tpu_custom_call.1} parent=5 // pred_region
        %s163 = ssub.s32 %s12, 1
        %p164 = scmp.lt.s32.totalorder %s21, 2
        %s165 = scalar_select %p164, %s21, 2
        %p166 = scmp.lt.s32.totalorder %s22, 0
        %s167 = scalar_select %p166, %s22, 0
        %s168 = sadd.s32 %s167, %s165
        %s169 = smul.addr %s168, 4
        %s170 = scalar_lea.vmem %s0, %s169
        %p171 = pneg %p52
        %p172 = pneg %p49
        %p173 = pneg %p73
        %p174 = pneg %p70
        %p175 = pneg %p94
        %p176 = pneg %p91
        %p177 = pneg %p122
        %p178 = pneg %p119
        %s179 = sand.u32 %s109, 1
        %s180 = scalar_lea.sflag [#allocation3], %s179
        %s181 = sand.u32 %s109, 1
        %s182 = smul.addr %s181, 16
        %s183 = scalar_lea.vmem [#allocation2], %s182
        %p184 = scmp.lt.s32.totalorder %s21, 2
        %s185 = scalar_select %p184, %s21, 2
        %p186 = scmp.lt.s32.totalorder %s22, 0
        %s187 = scalar_select %p186, %s22, 0
        %s188 = sadd.s32 %s187, %s185
        %s189 = smul.addr %s188, 4
        %s190 = scalar_lea.vmem %s0, %s189
        %v191 = vld [vmem:[%s190] sm:$0x7]
        %v192 = vld [vmem:[%s1] sm:$0xff]
        %v193 = vld [vmem:[%s1 + $0x8] sm:$0xff]
        %v194 = vld [vmem:[%s1 + $0x10] sm:$0xff]
        %v195 = vld [vmem:[%s1 + $0x18] sm:$0xff]
        %197 = vset.pattern.permute.xlu0 0
        %198 = vperm.xlu0 %197, %v192
        %v199 = vpop.permute.xlu0 %198
        %202 = vset.pattern.permute.xlu0 0
        %203 = vperm.xlu0 %202, %v193
        %v204 = vpop.permute.xlu0 %203
        %207 = vset.pattern.permute.xlu0 0
        %208 = vperm.xlu0 %207, %v194
        %v209 = vpop.permute.xlu0 %208
        %212 = vset.pattern.permute.xlu0 0
        %213 = vperm.xlu0 %212, %v195
        %v214 = vpop.permute.xlu0 %213
        %v216 = vlaneseq
        %v217 = vshrl.u32 %v216, 7
        %v218 = vsub.s32 0, %v217
        %v219 = vrot.slane %v191, %v218
        %v220 = vmul.f32 %v199, %v219
        %v221 = vmul.f32 %v204, %v219
        %v222 = vmul.f32 %v209, %v219
        %v223 = vmul.f32 %v214, %v219
        %224 = vset.pattern.permute.xlu0 1
        %225 = vperm.xlu0 %224, %v192
        %v226 = vpop.permute.xlu0 %225
        %228 = vset.pattern.permute.xlu0 1
        %229 = vperm.xlu0 %228, %v193
        %v230 = vpop.permute.xlu0 %229
        %232 = vset.pattern.permute.xlu0 1
        %233 = vperm.xlu0 %232, %v194
        %v234 = vpop.permute.xlu0 %233
        %236 = vset.pattern.permute.xlu0 1
        %237 = vperm.xlu0 %236, %v195
        %v238 = vpop.permute.xlu0 %237
        %v240 = vlaneseq
        %v241 = vshrl.u32 %v240, 7
        %v242 = vsub.s32 1, %v241
        %v243 = vrot.slane %v191, %v242
        %v244 = vmul.f32 %v226, %v243
        %v245 = vmul.f32 %v230, %v243
        %v246 = vmul.f32 %v234, %v243
        %v247 = vmul.f32 %v238, %v243
        %v248 = vadd.f32 %v220, %v244
        %v249 = vadd.f32 %v221, %v245
        %v250 = vadd.f32 %v222, %v246
        %v251 = vadd.f32 %v223, %v247
        %252 = vset.pattern.permute.xlu0 2
        %253 = vperm.xlu0 %252, %v192
        %v254 = vpop.permute.xlu0 %253
        %256 = vset.pattern.permute.xlu0 2
        %257 = vperm.xlu0 %256, %v193
        %v258 = vpop.permute.xlu0 %257
        %260 = vset.pattern.permute.xlu0 2
        %261 = vperm.xlu0 %260, %v194
        %v262 = vpop.permute.xlu0 %261
        %264 = vset.pattern.permute.xlu0 2
        %265 = vperm.xlu0 %264, %v195
        %v266 = vpop.permute.xlu0 %265
        %v268 = vlaneseq
        %v269 = vshrl.u32 %v268, 7
        %v270 = vsub.s32 2, %v269
        %v271 = vrot.slane %v191, %v270
        %v272 = vmul.f32 %v254, %v271
        %v273 = vmul.f32 %v258, %v271
        %v274 = vmul.f32 %v262, %v271
        %v275 = vmul.f32 %v266, %v271
        %v276 = vadd.f32 %v248, %v272
        %v277 = vadd.f32 %v249, %v273
        %v278 = vadd.f32 %v250, %v274
        %v279 = vadd.f32 %v251, %v275
        %v280 = vld [vmem:[%s2] sm:$0xff]
        %v281 = vld [vmem:[%s2 + $0x8] sm:$0xff]
        %v282 = vld [vmem:[%s2 + $0x10] sm:$0xff]
        %v283 = vld [vmem:[%s2 + $0x18] sm:$0xff]
        %285 = vset.pattern.permute.xlu0 0
        %286 = vperm.xlu0 %285, %v280
        %v287 = vpop.permute.xlu0 %286
        %290 = vset.pattern.permute.xlu0 0
        %291 = vperm.xlu0 %290, %v281
        %v292 = vpop.permute.xlu0 %291
        %295 = vset.pattern.permute.xlu0 0
        %296 = vperm.xlu0 %295, %v282
        %v297 = vpop.permute.xlu0 %296
        %300 = vset.pattern.permute.xlu0 0
        %301 = vperm.xlu0 %300, %v283
        %v302 = vpop.permute.xlu0 %301
        %v304 = vadd.f32 %v276, %v287
        %v305 = vadd.f32 %v277, %v292
        %v306 = vadd.f32 %v278, %v297
        %v307 = vadd.f32 %v279, %v302
        %v308 = vmax.f32 %v304, 0.0
        %v309 = vmax.f32 %v305, 0.0
        %v310 = vmax.f32 %v306, 0.0
        %v311 = vmax.f32 %v307, 0.0
        %v312 = vpack.c.bf16 %v309, %v308
        %v313 = vpack.c.bf16 %v311, %v310
        %v316 = vunpack.c.l.b16 %v312
        %v317 = vunpack.c.h.b16 %v312
        %v318 = vunpack.c.l.b16 %v313
        %v319 = vunpack.c.h.b16 %v313
        %v320 = vpack.c.b16 %v316, %v316
        %v321 = vpack.c.b16 %v317, %v317
        %v322 = vpack.c.b16 %v318, %v318
        %v323 = vpack.c.b16 %v319, %v319
        %328 = vst [vmem:[%s183] sm:$0xf] %v320
        %329 = vst [vmem:[%s183 + $0x4] sm:$0xf] %v321
        %330 = vst [vmem:[%s183 + $0x8] sm:$0xf] %v322
        %331 = vst [vmem:[%s183 + $0xc] sm:$0xf] %v323
        %s332 = sand.u32 %s109, 1
        %s333 = scalar_lea.sflag [#allocation3], %s332
        %s334 = sand.u32 %s109, 1
        %s335 = smul.addr %s334, 16
        %s336 = scalar_lea.vmem [#allocation2], %s335
        // Predicated region
        $region33: #{tpu_custom_call.1} parent=31 // pred_check
          %p337 = pneg %p119
        $region34: #{tpu_custom_call.1} parent=31 // pred_check_branch
          %339 = sbr.rel (%p337) target = $region36
        $region35: #{tpu_custom_call.1} parent=31 // pred_region
          %s341 = ssub.s32 256, 256
          %342 = vsyncadd %s333, %s341
          %s343 = smul.addr %s21, 4
          %s344 = sadd.s32 %s22, %s343
          %s345 = smul.addr %s344, 64
          %s346 = scalar_lea.hbm %s3, %s345
          %s347 = sshll.u32 %s336, 4
          %s348 = int_to_ptr.vmem [resolvable:$true] %s347
          %353 = dma.vmem_to_hbm [thread:$0]  %s348, 256, %s346, %s333, 64, 64, 4
        $region36: #{tpu_custom_call.1} parent=31 // pred_fallthru
          _
      $region32: #{tpu_custom_call.1} parent=5 // pred_fallthru
        _
      %p354 = scmp.le.s32.totalorder 2, %s12
      // Predicated region
      $region37: #{tpu_custom_call.1} parent=5 // pred_check
        %p355 = pneg %p354
      $region38: #{tpu_custom_call.1} parent=5 // pred_check_branch
        %357 = sbr.rel (%p355) target = $region40
      $region39: #{tpu_custom_call.1} parent=5 // pred_region
        %s358 = ssub.s32 %s12, 2
        // Predicated region
        $region41: #{tpu_custom_call.1} parent=39 // pred_check
          %p359 = pneg %p125
        $region42: #{tpu_custom_call.1} parent=39 // pred_check_branch
          %361 = sbr.rel (%p359) target = $region44
        $region43: #{tpu_custom_call.1} parent=39 // pred_region
          %s362 = sand.u32 %s110, 1
          %s363 = scalar_lea.sflag [#allocation3], %s362
          %s364 = sand.u32 %s110, 1
          %s365 = smul.addr %s364, 16
          %s366 = scalar_lea.vmem [#allocation2], %s365
          %367 = dma.done %s363, 256
        $region44: #{tpu_custom_call.1} parent=39 // pred_fallthru
          _
      $region40: #{tpu_custom_call.1} parent=5 // pred_fallthru
        _
    $region6: #{tpu_custom_call.1} parent=1 // loop_footer
      %s16 = sadd.s32 1, %s12
    $region7: #{tpu_custom_call.1} parent=1 // loop_footer_branch
      %11 = sbr.rel target = $region3
    $region8: #{tpu_custom_call.1} parent=1 // loop_exit
      _
    %368 = vsyncpa [#allocation3], 1
    %s369 = scalar_lea.sflag [#allocation3], 1
    %370 = vsyncpa %s369, 1

</llo_original>
